<compile_context>
chip_gen: v7x
topology: tpu7x:2x2x1
jax: 0.10.0
libtpu: 0.0.40
codegen_flags: <defaults>
</compile_context>

<pallas_src>
import numpy as np
import jax
import jax.numpy as jnp
from jax.experimental import pallas as pl
from jax.experimental.pallas import tpu as pltpu

SIGMA_DATA = 0.5  # default sigma_data of EDMPrecond


def _edm_precond_kernel(x_ref, coef_ref, w_ref, out_ref):
    """One grid step = (FC rows) x (TILE_HW lanes); sublane- and lane-dense."""
    x = x_ref[...].astype(jnp.float32)       # upcast bf16 in-register (free on DMA)
    c_in = coef_ref[:, 0:1]                  # per-row scalars, broadcast along lanes
    c_skip = coef_ref[:, 1:2]
    c_out = coef_ref[:, 2:3]
    bias = coef_ref[:, 3:4]                  # b + emb * c_noise, folded per row

    x_in = c_in * x
    # Stand-in inner model (see TODO at top): block-diagonal 1x1 channel mix
    # (F copies of W on the diagonal) + per-row noise-embedding bias.
    f_x = jnp.dot(w_ref[...], x_in, preferred_element_type=jnp.float32) + bias

    # D_x = c_skip * x + c_out * F_x
    out_ref[...] = c_skip * x + c_out * f_x


def _vmem_capacity_bytes():
    try:
        return int(pltpu.get_tpu_info().vmem_capacity_bytes)
    except Exception:
        return 64 << 20  # conservative default (v7x per-TC VMEM)


def _pick_tiles(bt, c, hw, x_itemsize, vmem_cap):
    """VMEM- and layout-aware tile selection.

    Rows: FC = F*C capped at one MXU tile (128) and kept sublane-dense for the
    streamed x dtype (8 rows for 4-byte, 16 for 2-byte).  Lanes: TILE_HW, a
    multiple of 128 dividing HW (or HW itself), sized so the double-buffered
    working set stays under ~45% of this generation's VMEM, preferring >= 4
    total grid steps (>= 2 per v7x TensorCore).
    """
    sub = {4: 8, 2: 16, 1: 32}.get(x_itemsize, 8)
    f_cands = [f for f in range(1, bt + 1)
               if bt % f == 0 and f * c <= max(128, c)
               and ((f * c) % sub == 0 or f == bt)]
    if not f_cands:
        f_cands = [bt]                       # full-extent row block is always legal
    if hw % 128 == 0:
        t_cands = [t for t in range(128, hw + 1, 128) if hw % t == 0]
    else:
        t_cands = [hw]                       # full-extent lane block
    budget = int(0.45 * vmem_cap)
    best = None
    for f in f_cands:
        fc = f * c
        fc_lane = max(fc, 128)
        for t in t_cands:
            est = (2 * fc * t * x_itemsize   # x block, double-buffered
                   + 2 * fc * t * 4          # f32 out block, double-buffered
                   + 2 * fc * 128 * 4        # packed coeff block (lane-padded)
                   + 2 * fc * fc_lane * 4)   # block-diag weight (lane-padded)
            steps = (bt // f) * (hw // t)
            key = (est <= budget, min(steps, 4), fc * t, t)
            if best is None or key > best[0]:
                best = (key, f, t, est)
    _, f, t, est = best
    return f, t, est


def edm_precond(x, sigma_full, pred_x0_lats, w, b, emb):
    """x, sigma_full: (B, T, C, H, W). pred_x0_lats: (T,) uint8 per-frame flag.

    x is streamed in its native dtype (f32 or bf16) and upcast inside the kernel
    (matches `x = x.to(torch.float32)` in the module); output is f32.
    """
    B, T, C, H, W = x.shape
    BT, HW = B * T, H * W

    vmem_cap = _vmem_capacity_bytes()
    x_itemsize = jnp.dtype(x.dtype).itemsize
    F, THW, est_bytes = _pick_tiles(BT, C, HW, x_itemsize, vmem_cap)
    FC = F * C

    # Per-frame sigma (constant over C,H,W in the EDM setup; same extraction the
    # module uses for c_noise).
    sig = sigma_full[:, :, 0, 0, 0].reshape(BT).astype(jnp.float32)

    # Per-frame preconditioning scalars (a few scalar FLOPs, fused by XLA).
    sd2 = jnp.float32(SIGMA_DATA * SIGMA_DATA)
    denom = sig * sig + sd2
    c_skip = sd2 / denom
    c_out = sig * jnp.float32(SIGMA_DATA) / jnp.sqrt(denom)
    c_in = 1.0 / jnp.sqrt(denom)
    c_noise = jnp.log(jnp.maximum(sig, 1e-5)) / 4.0            # (BT,)

    # `if pred_x0.lats.bool().any():` is a Python-time branch on an init-time constant.
    if bool(np.asarray(pred_x0_lats).astype(bool).any()):
        p = jnp.broadcast_to(
            pred_x0_lats.astype(jnp.float32)[None, :], (B, T)).reshape(BT)
        c_skip = c_skip * (1.0 - p)
        c_out = c_out * (1.0 - p) + p

    # Per-row (frame-major, channel-minor) coefficients, packed into one (BT*C, 4)
    # array: [c_in, c_skip, c_out, bias] -> one DMA / one padded VMEM tile per block.
    cin_rows = jnp.repeat(c_in, C)
    cskip_rows = jnp.repeat(c_skip, C)
    cout_rows = jnp.repeat(c_out, C)
    bias_rows = (b.reshape(1, C).astype(jnp.float32)
                 + emb.reshape(1, C).astype(jnp.float32) * c_noise[:, None]
                 ).reshape(BT * C)
    coef = jnp.stack([cin_rows, cskip_rows, cout_rows, bias_rows],
                     axis=1).astype(jnp.float32)               # (BT*C, 4)

    # Block-diagonal weight: F copies of the (C, C) channel mix on the diagonal,
    # so an F-frame row block is a single (FC, FC) @ (FC, THW) matmul.  FC is
    # capped at one MXU tile so the off-diagonal zeros live inside the tile pad.
    w_blk = jnp.kron(jnp.eye(F, dtype=jnp.float32), w.astype(jnp.float32))

    x2d = x.reshape(BT * C, HW)                                # native dtype

    vmem_limit = int(min(0.85 * vmem_cap, max(32 << 20, 4 * est_bytes)))
    cost = pl.CostEstimate(
        flops=2 * BT * C * FC * HW + 5 * BT * C * HW,
        transcendentals=0,
        bytes_accessed=(BT * C * HW * (x_itemsize + 4)          # read x, write f32 out
                        + BT * C * 4 * 4 + FC * FC * 4))        # coeffs + weight

    out = pl.pallas_call(
        _edm_precond_kernel,
        out_shape=jax.ShapeDtypeStruct((BT * C, HW), jnp.float32),
        grid_spec=pltpu.PrefetchScalarGridSpec(
            num_scalar_prefetch=0,
            grid=(BT // F, HW // THW),
            in_specs=[
                pl.BlockSpec((FC, THW), lambda i, j: (i, j)),   # x tile
                pl.BlockSpec((FC, 4), lambda i, j: (i, 0)),     # packed coeffs
                pl.BlockSpec((FC, FC), lambda i, j: (0, 0)),    # block-diag W (resident)
            ],
            out_specs=pl.BlockSpec((FC, THW), lambda i, j: (i, j)),
        ),
        compiler_params=pltpu.CompilerParams(
            dimension_semantics=("parallel", "parallel"),
            vmem_limit_bytes=vmem_limit),
        cost_estimate=cost,
    )(x2d, coef, w_blk)

    return out.reshape(B, T, C, H, W)


def edm_precond_ref(x, sigma_full, pred_x0_lats, w, b, emb):
    """Pure-JAX reference mirroring the PyTorch forward semantics."""
    x = x.astype(jnp.float32)
    sigma_full = sigma_full.astype(jnp.float32)
    B, T, C, H, W = x.shape
    sd2 = SIGMA_DATA ** 2
    c_skip = sd2 / (sigma_full ** 2 + sd2)
    c_out = sigma_full * SIGMA_DATA / jnp.sqrt(sigma_full ** 2 + sd2)
    c_in = 1.0 / jnp.sqrt(sd2 + sigma_full ** 2)
    c_noise = jnp.log(jnp.maximum(sigma_full[:, :, 0, 0, 0], 1e-5)) / 4.0  # (B, T)
    if bool(np.asarray(pred_x0_lats).astype(bool).any()):
        p = pred_x0_lats.astype(jnp.float32)[None, :, None, None, None]
        c_skip = c_skip * (1.0 - p)
        c_out = c_out * (1.0 - p) + p
    x_in = (c_in * x).reshape(B * T, C, H * W)
    f_x = jnp.einsum('oc,ncs->nos', w.astype(jnp.float32), x_in,
                     precision=jax.lax.Precision.HIGHEST) \
        + b[None].astype(jnp.float32) \
        + emb[None].astype(jnp.float32) * c_noise.reshape(B * T, 1, 1)
    f_x = f_x.reshape(B, T, C, H, W)
    return c_skip * x + c_out * f_x


if __name__ == "__main__":
    B, T, C, H, W = 2, 4, 4, 16, 16
    key = jax.random.PRNGKey(0)
    k1, k2, k3, k4, k5 = jax.random.split(key, 5)

    x = jax.random.normal(k1, (B, T, C, H, W), jnp.float32)
    # per-frame sigma, broadcast elementwise to x's shape (matches sigma_full usage)
    sigma_frame = jnp.exp(jax.random.normal(k2, (B, T), jnp.float32))
    sigma_full = jnp.broadcast_to(
        sigma_frame[:, :, None, None, None], (B, T, C, H, W))
    pred_x0_lats = jnp.array([0, 1, 0, 0], dtype=jnp.uint8)  # per-frame pred_x0 flags

    # deterministic stand-in model parameters
    w = 0.1 * jax.random.normal(k3, (C, C), jnp.float32)
    b = 0.1 * jax.random.normal(k4, (C, 1), jnp.float32)
    emb = 0.1 * jax.random.normal(k5, (C, 1), jnp.float32)

    # f32-streamed path
    d_x = jax.block_until_ready(edm_precond(x, sigma_full, pred_x0_lats, w, b, emb))
    ref = jax.block_until_ready(
        edm_precond_ref(x, sigma_full, pred_x0_lats, w, b, emb))
    np.testing.assert_allclose(np.asarray(d_x), np.asarray(ref),
                               rtol=1e-3, atol=1e-3)

    # bf16-streamed path (halves the x HBM read; upcast happens inside the kernel)
    x16 = x.astype(jnp.bfloat16)
    d_x16 = jax.block_until_ready(
        edm_precond(x16, sigma_full, pred_x0_lats, w, b, emb))
    ref16 = jax.block_until_ready(
        edm_precond_ref(x16.astype(jnp.float32), sigma_full, pred_x0_lats, w, b, emb))
    np.testing.assert_allclose(np.asarray(d_x16), np.asarray(ref16),
                               rtol=2e-2, atol=2e-2)

    print("KERNEL_OK")
</pallas_src>

<mosaic_0001>
module attributes {stable_mosaic.version = 11 : i64} {
  func.func @_edm_precond_kernel(%arg0: i32, %arg1: i32, %arg2: memref<8x256xf32, #tpu.memory_space<vmem>>, %arg3: memref<8x4xf32, #tpu.memory_space<vmem>>, %arg4: memref<8x8xf32, #tpu.memory_space<vmem>>, %arg5: memref<8x256xf32, #tpu.memory_space<vmem>>) attributes {dimension_semantics = [#tpu.dimension_semantics<parallel>, #tpu.dimension_semantics<parallel>], iteration_bounds = array<i64: 4, 1>, scalar_prefetch = 0 : i64, scratch_operands = 0 : i64, tpu.core_type = #tpu.core_type<tc>, window_params = [{transform_indices = @transform_0, window_bounds = array<i64: 8, 256>}, {transform_indices = @transform_1, window_bounds = array<i64: 8, 4>}, {pipeline_mode = #tpu.pipeline_mode<synchronous>, transform_indices = @transform_2, window_bounds = array<i64: 8, 8>}, {transform_indices = @transform_3, window_bounds = array<i64: 8, 256>}]} {
    %c0 = arith.constant 0 : index
    %c0_0 = arith.constant 0 : index
    %0 = vector.load %arg2[%c0, %c0_0] : memref<8x256xf32, #tpu.memory_space<vmem>>, vector<8x256xf32>
    %c0_1 = arith.constant 0 : index
    %c0_2 = arith.constant 0 : index
    %1 = vector.load %arg3[%c0_1, %c0_2] : memref<8x4xf32, #tpu.memory_space<vmem>>, vector<8x1xf32>
    %c0_3 = arith.constant 0 : index
    %c1 = arith.constant 1 : index
    %2 = vector.load %arg3[%c0_3, %c1] : memref<8x4xf32, #tpu.memory_space<vmem>>, vector<8x1xf32>
    %c0_4 = arith.constant 0 : index
    %c2 = arith.constant 2 : index
    %3 = vector.load %arg3[%c0_4, %c2] : memref<8x4xf32, #tpu.memory_space<vmem>>, vector<8x1xf32>
    %c0_5 = arith.constant 0 : index
    %c3 = arith.constant 3 : index
    %4 = vector.load %arg3[%c0_5, %c3] : memref<8x4xf32, #tpu.memory_space<vmem>>, vector<8x1xf32>
    %5 = vector.broadcast %1 : vector<8x1xf32> to vector<8x256xf32>
    %6 = arith.mulf %5, %0 : vector<8x256xf32>
    %c0_6 = arith.constant 0 : index
    %c0_7 = arith.constant 0 : index
    %7 = vector.load %arg4[%c0_6, %c0_7] : memref<8x8xf32, #tpu.memory_space<vmem>>, vector<8x8xf32>
    %cst = arith.constant dense<0.000000e+00> : vector<8x256xf32>
    %8 = tpu.matmul %7, %6, %cst {dimension_numbers = #tpu.dot_dimension_numbers<[1], [0], [0], [1], [0, 0, 1, 1], [], []>} : vector<8x8xf32>, vector<8x256xf32>, vector<8x256xf32> -> vector<8x256xf32>
    %9 = vector.broadcast %4 : vector<8x1xf32> to vector<8x256xf32>
    %10 = arith.addf %8, %9 : vector<8x256xf32>
    %11 = vector.broadcast %2 : vector<8x1xf32> to vector<8x256xf32>
    %12 = arith.mulf %11, %0 : vector<8x256xf32>
    %13 = vector.broadcast %3 : vector<8x1xf32> to vector<8x256xf32>
    %14 = arith.mulf %13, %10 : vector<8x256xf32>
    %15 = arith.addf %12, %14 : vector<8x256xf32>
    %c0_8 = arith.constant 0 : index
    %c0_9 = arith.constant 0 : index
    %16 = vector.load %arg5[%c0_8, %c0_9] : memref<8x256xf32, #tpu.memory_space<vmem>>, vector<8x256xf32>
    tpu.vector_store %arg5[%c0_8, %c0_9], %15 {strides = array<i32>} : memref<8x256xf32, #tpu.memory_space<vmem>>, vector<8x256xf32>,
    return
  }
  func.func @transform_0(%arg0: i32, %arg1: i32) -> (i32, i32) {
    %c0_i32 = arith.constant 0 : i32
    return %arg0, %arg1 : i32, i32
  }
  func.func @transform_1(%arg0: i32, %arg1: i32) -> (i32, i32) {
    %c0_i32 = arith.constant 0 : i32
    %c0_i32_0 = arith.constant 0 : i32
    return %arg0, %c0_i32 : i32, i32
  }
  func.func @transform_2(%arg0: i32, %arg1: i32) -> (i32, i32) {
    %c0_i32 = arith.constant 0 : i32
    %c0_i32_0 = arith.constant 0 : i32
    %c0_i32_1 = arith.constant 0 : i32
    return %c0_i32, %c0_i32_0 : i32, i32
  }
  func.func @transform_3(%arg0: i32, %arg1: i32) -> (i32, i32) {
    %c0_i32 = arith.constant 0 : i32
    return %arg0, %arg1 : i32, i32
  }
}

</mosaic_0001>

<llo_original>
// kernel: tpu_custom_call.1
$region0: #{tpu_custom_call.1}
  #allocation0 [shape = 'u32[]', space=smem, size = 0x4, offset = 0x4, fixed_abs, tag = 'smem constant byte address 0x4 - core index']
  #allocation1 [shape = 'u32[144,128]{1,0:T(1,128)}', space=vmem, size = 0x12000, scoped, tag = 'internal scratch']
  %s0 = inlined_call_operand.hbm [shape: f32[32,256], index: 0, kind: input, shape index: {}]
  %s1 = inlined_call_operand.vmem [shape: f32[32,4], index: 1, kind: input, shape index: {}]
  %s2 = inlined_call_operand.vmem [shape: f32[8,8], index: 2, kind: input, shape index: {}]
  %s3 = inlined_call_operand.hbm [shape: f32[32,256], index: 3, kind: output, shape index: {}]
  %s4 = sld [smem:[#allocation0]]
  $region49: #{tpu_custom_call.1} parent=0
    _
  %s6 = ssub.s32 1, %s4
  %s7 = scalar_select 0, %s6, %s4
  $region1: #{tpu_custom_call.1} parent=0
    #allocation2 [shape = 'u8[16384]{0}', space=vmem, size = 0x4000, scoped, tag = 'input window, operand 0']
    #allocation3 [shape = 's32[2]{0}', space=sflag, size = 0x8, scoped, tag = 'scoped memory for tpu_custom_call.1']
    #allocation4 [shape = 's32[2]{0}', space=sflag, size = 0x8, scoped, tag = 'scoped memory for tpu_custom_call.1']
    #allocation5 [shape = 'u8[16384]{0}', space=vmem, size = 0x4000, scoped, tag = 'output window, operand 0']
    %8 = vsyncpa [#allocation3], 0
    %s9 = scalar_lea.sflag [#allocation3], 1
    %10 = vsyncpa %s9, 0
    %11 = vsyncpa [#allocation4], 0
    %s12 = scalar_lea.sflag [#allocation4], 1
    %13 = vsyncpa %s12, 0
    loop: start=0, step=1, limit=6
    $region2: #{tpu_custom_call.1} parent=1 // loop_pre_header
      _
    $region3: #{tpu_custom_call.1} parent=1 // loop_header
      %s15 = sphi 0, %s19
      %p16 = scmp.ge.s32.totalorder %s15, 6
      %s22 = sphi 0, %s34
      %s23 = sphi 0, %s30
      %s24 = sphi 0, %s22
      %s25 = sphi 0, %s23
      %s26 = sphi 0, %s24
      %s27 = sphi 0, %s25
      %s39 = sphi 0, %s41
      %s42 = sphi 0, %s39
      %s43 = sphi 0, %s42
      %s59 = sphi 0, %s43
      %s65 = sphi 0, %s67
      %s68 = sphi 0, %s65
      %s69 = sphi 0, %s68
      %s85 = sphi 0, %s69
      %s89 = sphi 0, %s89
      %s91 = sphi 0, %s89
      %s92 = sphi 0, %s91
      %s106 = sphi 0, %s92
      %s114 = sphi 0, %s116
      %s117 = sphi 0, %s114
      %s118 = sphi 0, %s117
      %s134 = sphi 0, %s118
    $region4: #{tpu_custom_call.1} parent=1 // loop_header_branch
      %18 = sbr.rel (%p16) target = $region8
    $region5: #{tpu_custom_call.1} parent=1 // loop_body
      %s20 = ssub.s32 %s15, 1
      %s21 = ssub.s32 %s15, 2
      %s28 = sadd.s32 1, %s23
      %p29 = scmp.ge.s32.totalorder %s28, 1
      %s30 = scalar_select %p29, 0, %s28
      %s31 = sadd.s32 1, %s22
      %s32 = scalar_select %p29, %s31, %s22
      %p33 = scmp.ge.s32.totalorder %s32, 4
      %s34 = scalar_select %p33, 0, %s32
      %s35 = ssub.s32 %s22, %s34
      %s36 = ssub.s32 %s23, %s30
      %s37 = sor.u32 %s35, %s36
      %p38 = scmp.eq.s32.totalorder %s37, 0
      %s40 = sadd.s32 %s39, 1
      %s41 = scalar_select %p38, %s39, %s40
      %p44 = pneg %p38
      %p45 = scmp.eq.s32.totalorder %s15, 3
      %p46 = por %p44, %p45
      %p47 = scmp.ne.s32.totalorder %s39, %s42
      %p48 = scmp.eq.s32.totalorder %s15, 0
      %p49 = por %p47, %p48
      %p50 = scmp.ne.s32.totalorder %s39, %s42
      %p51 = scmp.eq.s32.totalorder %s20, 3
      %p52 = por %p50, %p51
      %p53 = scmp.ne.s32.totalorder %s42, %s43
      %p54 = scmp.eq.s32.totalorder %s20, 0
      %p55 = por %p53, %p54
      %p56 = scmp.ne.s32.totalorder %s42, %s43
      %p57 = scmp.eq.s32.totalorder %s21, 3
      %p58 = por %p56, %p57
      %p60 = scmp.ne.s32.totalorder %s43, %s59
      %p61 = scmp.eq.s32.totalorder %s21, 0
      %p62 = por %p60, %p61
      %s63 = ssub.s32 %s22, %s34
      %p64 = scmp.eq.s32.totalorder %s63, 0
      %s66 = sadd.s32 %s65, 1
      %s67 = scalar_select %p64, %s65, %s66
      %p70 = pneg %p64
      %p71 = scmp.eq.s32.totalorder %s15, 3
      %p72 = por %p70, %p71
      %p73 = scmp.ne.s32.totalorder %s65, %s68
      %p74 = scmp.eq.s32.totalorder %s15, 0
      %p75 = por %p73, %p74
      %p76 = scmp.ne.s32.totalorder %s65, %s68
      %p77 = scmp.eq.s32.totalorder %s20, 3
      %p78 = por %p76, %p77
      %p79 = scmp.ne.s32.totalorder %s68, %s69
      %p80 = scmp.eq.s32.totalorder %s20, 0
      %p81 = por %p79, %p80
      %p82 = scmp.ne.s32.totalorder %s68, %s69
      %p83 = scmp.eq.s32.totalorder %s21, 3
      %p84 = por %p82, %p83
      %p86 = scmp.ne.s32.totalorder %s69, %s85
      %p87 = scmp.eq.s32.totalorder %s21, 0
      %p88 = por %p86, %p87
      %s90 = sadd.s32 %s89, 1
      %p93 = scmp.eq.s32.totalorder %s15, 3
      %p94 = scmp.ne.s32.totalorder %s89, %s91
      %p95 = scmp.eq.s32.totalorder %s15, 0
      %p96 = por %p94, %p95
      %p97 = scmp.ne.s32.totalorder %s89, %s91
      %p98 = scmp.eq.s32.totalorder %s20, 3
      %p99 = por %p97, %p98
      %p100 = scmp.ne.s32.totalorder %s91, %s92
      %p101 = scmp.eq.s32.totalorder %s20, 0
      %p102 = por %p100, %p101
      %p103 = scmp.ne.s32.totalorder %s91, %s92
      %p104 = scmp.eq.s32.totalorder %s21, 3
      %p105 = por %p103, %p104
      %p107 = scmp.ne.s32.totalorder %s92, %s106
      %p108 = scmp.eq.s32.totalorder %s21, 0
      %p109 = por %p107, %p108
      %s110 = ssub.s32 %s22, %s34
      %s111 = ssub.s32 %s23, %s30
      %s112 = sor.u32 %s110, %s111
      %p113 = scmp.eq.s32.totalorder %s112, 0
      %s115 = sadd.s32 %s114, 1
      %s116 = scalar_select %p113, %s114, %s115
      %p119 = pneg %p113
      %p120 = scmp.eq.s32.totalorder %s15, 3
      %p121 = por %p119, %p120
      %p122 = scmp.ne.s32.totalorder %s114, %s117
      %p123 = scmp.eq.s32.totalorder %s15, 0
      %p124 = por %p122, %p123
      %p125 = scmp.ne.s32.totalorder %s114, %s117
      %p126 = scmp.eq.s32.totalorder %s20, 3
      %p127 = por %p125, %p126
      %p128 = scmp.ne.s32.totalorder %s117, %s118
      %p129 = scmp.eq.s32.totalorder %s20, 0
      %p130 = por %p128, %p129
      %p131 = scmp.ne.s32.totalorder %s117, %s118
      %p132 = scmp.eq.s32.totalorder %s21, 3
      %p133 = por %p131, %p132
      %p135 = scmp.ne.s32.totalorder %s118, %s134
      %p136 = scmp.eq.s32.totalorder %s21, 0
      %p137 = por %p135, %p136
      %p138 = scmp.le.s32.totalorder 1, %s15
      %p139 = scmp.lt.s32.totalorder %s15, 5
      %p140 = pnand %p138, %p139
      %p141 = pneg %p140
      // Predicated region
      $region9: #{tpu_custom_call.1} parent=5 // pred_check
        _
      $region10: #{tpu_custom_call.1} parent=5 // pred_check_branch
        %143 = sbr.rel (%p140) target = $region12
      $region11: #{tpu_custom_call.1} parent=5 // pred_region
        %s144 = ssub.s32 %s15, 1
        // Predicated region
        $region13: #{tpu_custom_call.1} parent=11 // pred_check
          %p145 = pneg %p102
        $region14: #{tpu_custom_call.1} parent=11 // pred_check_branch
          %147 = sbr.rel (%p145) target = $region16
        $region15: #{tpu_custom_call.1} parent=11 // pred_region
          _
        $region16: #{tpu_custom_call.1} parent=11 // pred_fallthru
          _
      $region12: #{tpu_custom_call.1} parent=5 // pred_fallthru
        _
      %p148 = scmp.lt.s32.totalorder %s15, 4
      // Predicated region
      $region17: #{tpu_custom_call.1} parent=5 // pred_check
        %p149 = pneg %p148
      $region18: #{tpu_custom_call.1} parent=5 // pred_check_branch
        %151 = sbr.rel (%p149) target = $region20
      $region19: #{tpu_custom_call.1} parent=5 // pred_region
        // Predicated region
        $region21: #{tpu_custom_call.1} parent=19 // pred_check
          %p152 = pneg %p49
        $region22: #{tpu_custom_call.1} parent=19 // pred_check_branch
          %154 = sbr.rel (%p152) target = $region24
        $region23: #{tpu_custom_call.1} parent=19 // pred_region
          %s155 = sand.u32 %s39, 1
          %s156 = scalar_lea.sflag [#allocation3], %s155
          %s157 = sand.u32 %s39, 1
          %s158 = smul.addr %s157, 16
          %s159 = scalar_lea.vmem [#allocation2], %s158
          %s160 = smul.u32 2, %s23
          %s162 = ssub.s32 256, 256
          %163 = vsyncadd %s156, %s162
          %s164 = smul.addr %s22, 2
          %s165 = sadd.s32 %s160, %s164
          %s166 = smul.addr %s165, 128
          %s167 = scalar_lea.hbm %s0, %s166
          %s169 = sshll.u32 %s159, 4
          %s170 = int_to_ptr.vmem [resolvable:$true] %s169
          %172 = dma.hbm_to_vmem [thread:$0]  %s167, 256, %s170, %s156
        $region24: #{tpu_custom_call.1} parent=19 // pred_fallthru
          _
        // Predicated region
        $region25: #{tpu_custom_call.1} parent=19 // pred_check
          %p173 = pneg %p75
        $region26: #{tpu_custom_call.1} parent=19 // pred_check_branch
          %175 = sbr.rel (%p173) target = $region28
        $region27: #{tpu_custom_call.1} parent=19 // pred_region
          %p176 = scmp.lt.s32.totalorder %s22, 3
          %s177 = scalar_select %p176, %s22, 3
          %s178 = smul.addr %s177, 8
          %s179 = scalar_lea.vmem %s1, %s178
        $region28: #{tpu_custom_call.1} parent=19 // pred_fallthru
          _
      $region20: #{tpu_custom_call.1} parent=5 // pred_fallthru
        _
      %p180 = scmp.le.s32.totalorder 1, %s15
      %p181 = scmp.lt.s32.totalorder %s15, 5
      %p182 = pnand %p180, %p181
      %p183 = pneg %p182
      // Predicated region
      $region29: #{tpu_custom_call.1} parent=5 // pred_check
        _
      $region30: #{tpu_custom_call.1} parent=5 // pred_check_branch
        %185 = sbr.rel (%p182) target = $region32
      $region31: #{tpu_custom_call.1} parent=5 // pred_region
        %s186 = ssub.s32 %s15, 1
        %s187 = sand.u32 %s42, 1
        %s188 = scalar_lea.sflag [#allocation3], %s187
        %s189 = sand.u32 %s42, 1
        %s190 = smul.addr %s189, 16
        %s191 = scalar_lea.vmem [#allocation2], %s190
        // Predicated region
        $region33: #{tpu_custom_call.1} parent=31 // pred_check
          %p192 = pneg %p55
        $region34: #{tpu_custom_call.1} parent=31 // pred_check_branch
          %194 = sbr.rel (%p192) target = $region36
        $region35: #{tpu_custom_call.1} parent=31 // pred_region
          %195 = dma.done %s188, 256
        $region36: #{tpu_custom_call.1} parent=31 // pred_fallthru
          _
        %s196 = sand.u32 %s42, 1
        %s197 = scalar_lea.sflag [#allocation3], %s196
        %s198 = sand.u32 %s42, 1
        %s199 = smul.addr %s198, 16
        %s200 = scalar_lea.vmem [#allocation2], %s199
        %p201 = pneg %p55
        %p202 = pneg %p52
        %p203 = scmp.lt.s32.totalorder %s24, 3
        %s204 = scalar_select %p203, %s24, 3
        %s205 = smul.addr %s204, 8
        %s206 = scalar_lea.vmem %s1, %s205
        %p207 = pneg %p81
        %p208 = pneg %p78
        %p209 = pneg %p102
        %p210 = pneg %p99
        %p211 = pneg %p130
        %p212 = pneg %p127
        %s213 = sand.u32 %s117, 1
        %s214 = scalar_lea.sflag [#allocation4], %s213
        %s215 = sand.u32 %s117, 1
        %s216 = smul.addr %s215, 16
        %s217 = scalar_lea.vmem [#allocation5], %s216
        %s218 = smul.u32 2, %s25
        %p219 = scmp.lt.s32.totalorder %s24, 3
        %s220 = scalar_select %p219, %s24, 3
        %s221 = smul.addr %s220, 8
        %s222 = scalar_lea.vmem %s1, %s221
        %s223 = smul.u32 2, %s25
        %v224 = vld [vmem:[%s191] sm:$0xff]
        %v225 = vld [vmem:[%s191 + $0x8] sm:$0xff]
        %v226 = vld [vmem:[%s222] sm:$0xff]
        %228 = vset.pattern.permute.xlu0 0
        %229 = vperm.xlu0 %228, %v226
        %v230 = vpop.permute.xlu0 %229
        %v232 = vmul.f32 %v230, %v224
        %v233 = vmul.f32 %v230, %v225
        %v234 = vld [vmem:[%s2] sm:$0xff]
        %235 = vset.pattern.permute.xlu0 3
        %236 = vperm.xlu0 %235, %v226
        %v237 = vpop.permute.xlu0 %236
        %vm239 = vcmask 64512
        %v241 = vsel %vm239, %v234, 0
        %243 = vmatprep.subr.mxu0 %v233
        %244 = vmatpush1.msra.mxu0 %v232
        %245 = vmatprep.subr.mxu0 0.0
        %246 = vmatpush1.msra.mxu0 0.0
        %247 = vmatprep.subr.mxu0 0.0
        %248 = vmatpush1.msra.mxu0 0.0
        %249 = vmatprep.subr.mxu0 0.0
        %250 = vmatpush1.msra.mxu0 0.0
        %251 = vmatprep.subr.mxu0 0.0
        %252 = vmatpush1.msra.mxu0 0.0
        %253 = vmatprep.subr.mxu0 0.0
        %254 = vmatpush1.msra.mxu0 0.0
        %255 = vmatprep.subr.mxu0 0.0
        %256 = vmatpush1.msra.mxu0 0.0
        %257 = vmatprep.subr.mxu0 0.0
        %258 = vmatpush1.msra.mxu0 0.0
        %259 = vmatprep.subr.mxu0 0.0
        %260 = vmatpush1.msra.mxu0 0.0
        %261 = vmatprep.subr.mxu0 0.0
        %262 = vmatpush1.msra.mxu0 0.0
        %263 = vmatprep.subr.mxu0 0.0
        %264 = vmatpush1.msra.mxu0 0.0
        %265 = vmatprep.subr.mxu0 0.0
        %266 = vmatpush1.msra.mxu0 0.0
        %267 = vmatprep.subr.mxu0 0.0
        %268 = vmatpush1.msra.mxu0 0.0
        %269 = vmatprep.subr.mxu0 0.0
        %270 = vmatpush1.msra.mxu0 0.0
        %271 = vmatprep.subr.mxu0 0.0
        %272 = vmatpush1.msra.mxu0 0.0
        %273 = vmatprep.subr.mxu0 0.0
        %274 = vmatpush1.msra.mxu0 0.0
        %275 = vmatprep.subr.mxu0 0.0
        %276 = vmatpush1.msra.mxu0 0.0
        %277 = vmatprep.subr.mxu0 0.0
        %278 = vmatpush1.msra.mxu0 0.0
        %279 = vmatprep.subr.mxu0 0.0
        %280 = vmatpush1.msra.mxu0 0.0
        %281 = vmatprep.subr.mxu0 0.0
        %282 = vmatpush1.msra.mxu0 0.0
        %283 = vmatprep.subr.mxu0 0.0
        %284 = vmatpush1.msra.mxu0 0.0
        %285 = vmatprep.subr.mxu0 0.0
        %286 = vmatpush1.msra.mxu0 0.0
        %287 = vmatprep.subr.mxu0 0.0
        %288 = vmatpush1.msra.mxu0 0.0
        %289 = vmatprep.subr.mxu0 0.0
        %290 = vmatpush1.msra.mxu0 0.0
        %291 = vmatprep.subr.mxu0 0.0
        %292 = vmatpush1.msra.mxu0 0.0
        %293 = vmatprep.subr.mxu0 0.0
        %294 = vmatpush1.msra.mxu0 0.0
        %295 = vmatprep.subr.mxu0 0.0
        %296 = vmatpush1.msra.mxu0 0.0
        %297 = vmatprep.subr.mxu0 0.0
        %298 = vmatpush1.msra.mxu0 0.0
        %299 = vmatprep.subr.mxu0 0.0
        %300 = vmatpush1.msra.mxu0 0.0
        %301 = vmatprep.subr.mxu0 0.0
        %302 = vmatpush1.msra.mxu0 0.0
        %303 = vmatprep.subr.mxu0 0.0
        %304 = vmatpush1.msra.mxu0 0.0
        %305 = vmatprep.subr.mxu0 0.0
        %306 = vmatpush1.msra.mxu0 0.0
        %307 = vmatprep.mubr.f32.mxu0 0.0
        %308 = vmatmul.mubr.f32.gmra.mrb[0].mxu0 %v241
        %v309 = vpop.f32.mrb[0].mxu0
        %v310 = vadd.f32 %v237, %v309
        %v311 = vpop.f32.mrb[0].mxu0
        %v312 = vadd.f32 %v237, %v311
        %313 = vdwg.mxu0
        %314 = vset.pattern.permute.xlu0 1
        %315 = vperm.xlu0 %314, %v226
        %v316 = vpop.permute.xlu0 %315
        %v318 = vmul.f32 %v316, %v224
        %v319 = vmul.f32 %v316, %v225
        %320 = vset.pattern.permute.xlu0 2
        %321 = vperm.xlu0 %320, %v226
        %v322 = vpop.permute.xlu0 %321
        %v324 = vmul.f32 %v322, %v310
        %v325 = vmul.f32 %v322, %v312
        %v326 = vadd.f32 %v318, %v324
        %v327 = vadd.f32 %v319, %v325
        %328 = vst [vmem:[%s217] sm:$0xff] %v326
        %329 = vst [vmem:[%s217 + $0x8] sm:$0xff] %v327
        %s330 = sand.u32 %s117, 1
        %s331 = scalar_lea.sflag [#allocation4], %s330
        %s332 = sand.u32 %s117, 1
        %s333 = smul.addr %s332, 16
        %s334 = scalar_lea.vmem [#allocation5], %s333
        // Predicated region
        $region37: #{tpu_custom_call.1} parent=31 // pred_check
          %p335 = pneg %p127
        $region38: #{tpu_custom_call.1} parent=31 // pred_check_branch
          %337 = sbr.rel (%p335) target = $region40
        $region39: #{tpu_custom_call.1} parent=31 // pred_region
          %s338 = smul.u32 2, %s25
          %s340 = ssub.s32 256, 256
          %341 = vsyncadd %s331, %s340
          %s342 = smul.addr %s24, 2
          %s343 = sadd.s32 %s338, %s342
          %s344 = smul.addr %s343, 128
          %s345 = scalar_lea.hbm %s3, %s344
          %s347 = sshll.u32 %s334, 4
          %s348 = int_to_ptr.vmem [resolvable:$true] %s347
          %350 = dma.vmem_to_hbm [thread:$0]  %s348, 256, %s345, %s331
        $region40: #{tpu_custom_call.1} parent=31 // pred_fallthru
          _
      $region32: #{tpu_custom_call.1} parent=5 // pred_fallthru
        _
      %p351 = scmp.le.s32.totalorder 2, %s15
      // Predicated region
      $region41: #{tpu_custom_call.1} parent=5 // pred_check
        %p352 = pneg %p351
      $region42: #{tpu_custom_call.1} parent=5 // pred_check_branch
        %354 = sbr.rel (%p352) target = $region44
      $region43: #{tpu_custom_call.1} parent=5 // pred_region
        %s355 = ssub.s32 %s15, 2
        // Predicated region
        $region45: #{tpu_custom_call.1} parent=43 // pred_check
          %p356 = pneg %p133
        $region46: #{tpu_custom_call.1} parent=43 // pred_check_branch
          %358 = sbr.rel (%p356) target = $region48
        $region47: #{tpu_custom_call.1} parent=43 // pred_region
          %s359 = sand.u32 %s118, 1
          %s360 = scalar_lea.sflag [#allocation4], %s359
          %s361 = sand.u32 %s118, 1
          %s362 = smul.addr %s361, 16
          %s363 = scalar_lea.vmem [#allocation5], %s362
          %364 = dma.done %s360, 256
        $region48: #{tpu_custom_call.1} parent=43 // pred_fallthru
          _
      $region44: #{tpu_custom_call.1} parent=5 // pred_fallthru
        _
    $region6: #{tpu_custom_call.1} parent=1 // loop_footer
      %s19 = sadd.s32 1, %s15
    $region7: #{tpu_custom_call.1} parent=1 // loop_footer_branch
      %14 = sbr.rel target = $region3
    $region8: #{tpu_custom_call.1} parent=1 // loop_exit
      _
    %365 = vsyncpa [#allocation3], 1
    %s366 = scalar_lea.sflag [#allocation3], 1
    %367 = vsyncpa %s366, 1
    %368 = vsyncpa [#allocation4], 1
    %s369 = scalar_lea.sflag [#allocation4], 1
    %370 = vsyncpa %s369, 1

</llo_original>
